<compile_context>
chip_gen: v5e
topology: v5e:2x2
jax: 0.10.0
libtpu: 0.0.40
codegen_flags: <defaults>
</compile_context>

<pallas_src>
import functools

import jax
import jax.numpy as jnp
from jax.experimental import pallas as pl
from jax.experimental.pallas import tpu as pltpu

_NEG_BIG = -1e30  # padded-class bias: exp(-1e30 - m) == 0 -> no softmax perturbation


def _log_softmax(logits):
    m = jnp.max(logits, axis=-1, keepdims=True)
    shifted = logits - m
    lse = jnp.log(jnp.sum(jnp.exp(shifted), axis=-1, keepdims=True))
    return shifted - lse


def _pad_output_params(wo, bo):
    """Pad Wo / bo lane dim up to a multiple of 128 for lane-dense output stores."""
    O = wo.shape[1]
    O_pad = ((O + 127) // 128) * 128
    wo_p = jnp.pad(wo, ((0, 0), (0, O_pad - O)))
    bo_p = jnp.pad(bo, ((0, 0), (0, O_pad - O)), constant_values=_NEG_BIG)
    return wo_p, bo_p, O_pad


# ---------------------------------------------------------------------------
# Single-step kernel: (x, h) -> (log_probs, h_new)   [matches module.forward]
# ---------------------------------------------------------------------------
def rnn_step_kernel(x_ref, h_ref, wx_ref, wh_ref, bh_ref, wo_ref, bo_ref,
                    out_ref, hnew_ref):
    # hidden = cat(x, h) @ W_hidden + b_hidden  ==  x @ Wx + h @ Wh + b_hidden
    h_new = (jnp.dot(x_ref[...], wx_ref[...], preferred_element_type=jnp.float32)
             + jnp.dot(h_ref[...].astype(wh_ref.dtype), wh_ref[...],
                       preferred_element_type=jnp.float32)
             + bh_ref[...])
    logits = jnp.dot(h_new.astype(wo_ref.dtype), wo_ref[...],
                     preferred_element_type=jnp.float32) + bo_ref[...]
    out_ref[...] = _log_softmax(logits).astype(out_ref.dtype)   # lane-dense (O padded)
    hnew_ref[...] = h_new.astype(hnew_ref.dtype)


@functools.partial(jax.jit, static_argnames=("compute_dtype",))
def rnn_encoder_step(x, h, wx, wh, bh, wo, bo, *, compute_dtype=jnp.float32):
    B = x.shape[0]
    H = wh.shape[1]
    O = wo.shape[1]
    wo_p, bo_p, O_pad = _pad_output_params(wo, bo)
    vmem = pl.BlockSpec(memory_space=pltpu.MemorySpace.VMEM)
    lp_pad, h_new = pl.pallas_call(
        rnn_step_kernel,
        out_shape=(jax.ShapeDtypeStruct((B, O_pad), jnp.float32),   # padded log-probs
                   jax.ShapeDtypeStruct((B, H), jnp.float32)),      # new hidden
        in_specs=[vmem] * 7,
        out_specs=(vmem, vmem),
    )(x.astype(compute_dtype), h, wx.astype(compute_dtype),
      wh.astype(compute_dtype), bh, wo_p.astype(compute_dtype), bo_p)
    return lp_pad[:, :O], h_new


# ---------------------------------------------------------------------------
# Sequence kernel: the whole RNN recurrence for one batch tile per grid step.
# grid = (batch_tiles,); T is an unrolled in-kernel loop; weights VMEM-resident.
# ---------------------------------------------------------------------------
def rnn_seq_kernel(x_ref, h0_ref, wx_ref, wh_ref, bh_ref, wo_ref, bo_ref,
                   out_ref, hlast_ref, hs_ref):
    T, Bb, I = x_ref.shape

    # Non-recurrent part of every timestep in ONE big MXU dot (128+ LHS rows):
    #   xw[t*Bb + b, :] = x[t, b, :] @ Wx + bh          (f32 accumulate)
    xw_all = (jnp.dot(x_ref[...].reshape(T * Bb, I), wx_ref[...],
                      preferred_element_type=jnp.float32)
              + bh_ref[...])                               # (T*Bb, H)

    # Serial recurrence; hidden state carried in vregs.  The Python loop is
    # fully unrolled at trace time, so all scratch stores use static offsets.
    wh = wh_ref[...]
    h = h0_ref[...].astype(jnp.float32)
    for t in range(T):
        h = (xw_all[t * Bb:(t + 1) * Bb, :]
             + jnp.dot(h.astype(wh.dtype), wh, preferred_element_type=jnp.float32))
        hs_ref[t * Bb:(t + 1) * Bb, :] = h                 # stash for batched proj

    # Output projection batched over the full tile + f32 log-softmax epilogue,
    # then a single lane-dense writeback (O padded to a multiple of 128).
    logits = (jnp.dot(hs_ref[...].astype(wo_ref.dtype), wo_ref[...],
                      preferred_element_type=jnp.float32)
              + bo_ref[...])                               # (T*Bb, O_pad)
    out_ref[...] = _log_softmax(logits).reshape(out_ref.shape).astype(out_ref.dtype)
    hlast_ref[...] = h.astype(hlast_ref.dtype)


@functools.partial(jax.jit, static_argnames=("block_b", "compute_dtype"))
def rnn_encoder_sequence(x_seq, h0, wx, wh, bh, wo, bo, *,
                         block_b=8, compute_dtype=jnp.float32):
    T, B, I = x_seq.shape
    H = wh.shape[1]
    O = wo.shape[1]
    assert B % block_b == 0 and block_b % 8 == 0
    nb = B // block_b
    wo_p, bo_p, O_pad = _pad_output_params(wo, bo)

    const = lambda b: (0, 0)
    in_specs = [
        pl.BlockSpec((T, block_b, I), lambda b: (0, b, 0)),   # whole-T x slab per tile
        pl.BlockSpec((block_b, H), lambda b: (b, 0)),         # h0 tile (f32)
        pl.BlockSpec((I, H), const),                          # Wx   (VMEM-resident)
        pl.BlockSpec((H, H), const),                          # Wh   (VMEM-resident)
        pl.BlockSpec((1, H), const),                          # bh   (f32)
        pl.BlockSpec((H, O_pad), const),                      # Wo   (padded, resident)
        pl.BlockSpec((1, O_pad), const),                      # bo   (padded, f32)
    ]
    out_specs = (
        pl.BlockSpec((T, block_b, O_pad), lambda b: (0, b, 0)),  # lane-dense log-probs
        pl.BlockSpec((block_b, H), lambda b: (b, 0)),            # final hidden
    )
    lp_pad, h_last = pl.pallas_call(
        rnn_seq_kernel,
        out_shape=(jax.ShapeDtypeStruct((T, B, O_pad), jnp.float32),
                   jax.ShapeDtypeStruct((B, H), jnp.float32)),
        grid_spec=pltpu.PrefetchScalarGridSpec(
            num_scalar_prefetch=0,
            grid=(nb,),
            in_specs=in_specs,
            out_specs=out_specs,
            scratch_shapes=[pltpu.VMEM((T * block_b, H), jnp.float32)],
        ),
        compiler_params=pltpu.CompilerParams(
            dimension_semantics=("parallel",),   # batch tiles feed both v7x cores
        ),
    )(x_seq.astype(compute_dtype), h0, wx.astype(compute_dtype),
      wh.astype(compute_dtype), bh, wo_p.astype(compute_dtype), bo_p)
    return lp_pad[..., :O], h_last


def init_params(key, input_size, hidden_size, output_size):
    """PyTorch nn.Linear-style init; hiddenLayer weight pre-split into Wx / Wh."""
    k1, k2, k3, k4 = jax.random.split(key, 4)
    bound_h = 1.0 / jnp.sqrt(input_size + hidden_size)
    w_hidden_t = jax.random.uniform(
        k1, (input_size + hidden_size, hidden_size), jnp.float32, -bound_h, bound_h)
    b_hidden = jax.random.uniform(k2, (1, hidden_size), jnp.float32, -bound_h, bound_h)
    bound_o = 1.0 / jnp.sqrt(hidden_size)
    w_output_t = jax.random.uniform(
        k3, (hidden_size, output_size), jnp.float32, -bound_o, bound_o)
    b_output = jax.random.uniform(k4, (1, output_size), jnp.float32, -bound_o, bound_o)
    wx = w_hidden_t[:input_size]      # [I, H]
    wh = w_hidden_t[input_size:]      # [H, H]
    return wx, wh, b_hidden, w_output_t, b_output


if __name__ == "__main__":
    I, H, O = 16, 32, 8
    B = 16          # 2 batch tiles of 8 rows -> "parallel" axis uses both v7x cores
    T = 16          # sequence length for the gridded variant

    key = jax.random.PRNGKey(0)
    kx, kxs, kp = jax.random.split(key, 3)

    wx, wh, bh, wo, bo = init_params(kp, I, H, O)
    hi = jax.lax.Precision.HIGHEST

    # ---- single step (exact module.forward semantics) ----
    x = jax.random.normal(kx, (B, I), jnp.float32)
    h0 = jnp.zeros((B, H), jnp.float32)   # initHidden() analogue, batched
    log_probs, h_new = rnn_encoder_step(x, h0, wx, wh, bh, wo, bo)
    jax.block_until_ready((log_probs, h_new))

    h_ref = jnp.dot(x, wx, precision=hi) + jnp.dot(h0, wh, precision=hi) + bh
    lp_ref = jax.nn.log_softmax(jnp.dot(h_ref, wo, precision=hi) + bo, axis=1)
    assert jnp.allclose(h_new, h_ref, atol=5e-3, rtol=5e-3)
    assert jnp.allclose(log_probs, lp_ref, atol=5e-3, rtol=5e-3)

    # ---- full sequence folded into one pallas_call (f32 operands) ----
    x_seq = jax.random.normal(kxs, (T, B, I), jnp.float32)
    lp_seq, h_last = rnn_encoder_sequence(x_seq, h0, wx, wh, bh, wo, bo, block_b=8)
    jax.block_until_ready((lp_seq, h_last))

    def ref_step(h, x_t):
        h_n = jnp.dot(x_t, wx, precision=hi) + jnp.dot(h, wh, precision=hi) + bh
        lp = jax.nn.log_softmax(jnp.dot(h_n, wo, precision=hi) + bo, axis=1)
        return h_n, lp

    h_ref_last, lp_ref_seq = jax.lax.scan(ref_step, h0, x_seq)
    assert jnp.allclose(h_last, h_ref_last, atol=5e-3, rtol=5e-3)
    assert jnp.allclose(lp_seq, lp_ref_seq, atol=5e-3, rtol=5e-3)

    # ---- bf16 matmul operands (v6e/v7x MXU path); f32 accumulate + f32 epilogue ----
    lp_bf, h_bf = rnn_encoder_sequence(x_seq, h0, wx, wh, bh, wo, bo,
                                       block_b=8, compute_dtype=jnp.bfloat16)
    jax.block_until_ready((lp_bf, h_bf))
    assert jnp.allclose(h_bf, h_ref_last, atol=7e-2, rtol=7e-2)
    assert jnp.allclose(lp_bf, lp_ref_seq, atol=7e-2, rtol=7e-2)

    print("KERNEL_OK")
</pallas_src>

<mosaic_0001>
module attributes {stable_mosaic.version = 11 : i64} {
  func.func @rnn_step_kernel(%arg0: memref<16x16xf32, #tpu.memory_space<vmem>>, %arg1: memref<16x32xf32, #tpu.memory_space<vmem>>, %arg2: memref<16x32xf32, #tpu.memory_space<vmem>>, %arg3: memref<32x32xf32, #tpu.memory_space<vmem>>, %arg4: memref<1x32xf32, #tpu.memory_space<vmem>>, %arg5: memref<32x128xf32, #tpu.memory_space<vmem>>, %arg6: memref<1x128xf32, #tpu.memory_space<vmem>>, %arg7: memref<16x128xf32, #tpu.memory_space<vmem>>, %arg8: memref<16x32xf32, #tpu.memory_space<vmem>>) attributes {dimension_semantics = [], scalar_prefetch = 0 : i64, scratch_operands = 0 : i64, tpu.core_type = #tpu.core_type<tc>} {
    %c0 = arith.constant 0 : index
    %c0_0 = arith.constant 0 : index
    %0 = vector.load %arg0[%c0, %c0_0] : memref<16x16xf32, #tpu.memory_space<vmem>>, vector<16x16xf32>
    %c0_1 = arith.constant 0 : index
    %c0_2 = arith.constant 0 : index
    %1 = vector.load %arg2[%c0_1, %c0_2] : memref<16x32xf32, #tpu.memory_space<vmem>>, vector<16x32xf32>
    %cst = arith.constant dense<0.000000e+00> : vector<16x32xf32>
    %2 = tpu.matmul %0, %1, %cst {dimension_numbers = #tpu.dot_dimension_numbers<[1], [0], [0], [1], [0, 0, 1, 1], [], []>} : vector<16x16xf32>, vector<16x32xf32>, vector<16x32xf32> -> vector<16x32xf32>
    %c0_3 = arith.constant 0 : index
    %c0_4 = arith.constant 0 : index
    %3 = vector.load %arg1[%c0_3, %c0_4] : memref<16x32xf32, #tpu.memory_space<vmem>>, vector<16x32xf32>
    %c0_5 = arith.constant 0 : index
    %c0_6 = arith.constant 0 : index
    %4 = vector.load %arg3[%c0_5, %c0_6] : memref<32x32xf32, #tpu.memory_space<vmem>>, vector<32x32xf32>
    %cst_7 = arith.constant dense<0.000000e+00> : vector<16x32xf32>
    %5 = tpu.matmul %3, %4, %cst_7 {dimension_numbers = #tpu.dot_dimension_numbers<[1], [0], [0], [1], [0, 0, 1, 1], [], []>} : vector<16x32xf32>, vector<32x32xf32>, vector<16x32xf32> -> vector<16x32xf32>
    %6 = arith.addf %2, %5 : vector<16x32xf32>
    %c0_8 = arith.constant 0 : index
    %c0_9 = arith.constant 0 : index
    %7 = vector.load %arg4[%c0_8, %c0_9] : memref<1x32xf32, #tpu.memory_space<vmem>>, vector<1x32xf32>
    %8 = vector.broadcast %7 : vector<1x32xf32> to vector<16x32xf32>
    %9 = arith.addf %6, %8 : vector<16x32xf32>
    %c0_10 = arith.constant 0 : index
    %c0_11 = arith.constant 0 : index
    %10 = vector.load %arg5[%c0_10, %c0_11] : memref<32x128xf32, #tpu.memory_space<vmem>>, vector<32x128xf32>
    %cst_12 = arith.constant dense<0.000000e+00> : vector<16x128xf32>
    %11 = tpu.matmul %9, %10, %cst_12 {dimension_numbers = #tpu.dot_dimension_numbers<[1], [0], [0], [1], [0, 0, 1, 1], [], []>} : vector<16x32xf32>, vector<32x128xf32>, vector<16x128xf32> -> vector<16x128xf32>
    %c0_13 = arith.constant 0 : index
    %c0_14 = arith.constant 0 : index
    %12 = vector.load %arg6[%c0_13, %c0_14] : memref<1x128xf32, #tpu.memory_space<vmem>>, vector<1x128xf32>
    %13 = vector.broadcast %12 : vector<1x128xf32> to vector<16x128xf32>
    %14 = arith.addf %11, %13 : vector<16x128xf32>
    %cst_15 = arith.constant dense<0xFF800000> : vector<16xf32>
    %15 = vector.multi_reduction <maximumf>, %14, %cst_15 [1] : vector<16x128xf32> to vector<16xf32>
    %16 = vector.shape_cast %15 : vector<16xf32> to vector<16x1xf32>
    %17 = vector.broadcast %16 : vector<16x1xf32> to vector<16x128xf32>
    %18 = arith.subf %14, %17 : vector<16x128xf32>
    %19 = math.exp %18 : vector<16x128xf32>
    %cst_16 = arith.constant dense<0.000000e+00> : vector<16xf32>
    %20 = vector.multi_reduction <add>, %19, %cst_16 [1] : vector<16x128xf32> to vector<16xf32>
    %21 = vector.shape_cast %20 : vector<16xf32> to vector<16x1xf32>
    %22 = math.log %21 : vector<16x1xf32>
    %23 = vector.broadcast %22 : vector<16x1xf32> to vector<16x128xf32>
    %24 = arith.subf %18, %23 : vector<16x128xf32>
    %c0_17 = arith.constant 0 : index
    %c0_18 = arith.constant 0 : index
    %25 = vector.load %arg7[%c0_17, %c0_18] : memref<16x128xf32, #tpu.memory_space<vmem>>, vector<16x128xf32>
    tpu.vector_store %arg7[%c0_17, %c0_18], %24 {strides = array<i32>} : memref<16x128xf32, #tpu.memory_space<vmem>>, vector<16x128xf32>,
    %c0_19 = arith.constant 0 : index
    %c0_20 = arith.constant 0 : index
    %26 = vector.load %arg8[%c0_19, %c0_20] : memref<16x32xf32, #tpu.memory_space<vmem>>, vector<16x32xf32>
    tpu.vector_store %arg8[%c0_19, %c0_20], %9 {strides = array<i32>} : memref<16x32xf32, #tpu.memory_space<vmem>>, vector<16x32xf32>,
    return
  }
}

</mosaic_0001>

<llo_original>
// kernel: rnn_encoder_step.1
$region0: #{rnn_encoder_step.1}
  #allocation0 [shape = 'u32[]', space=smem, size = 0x4, offset = 0x4, fixed_abs, tag = 'smem constant byte address 0x4 - core index']
  #allocation1 [shape = 'u32[72,128]{1,0:T(1,128)}', space=vmem, size = 0x9000, scoped, tag = 'internal scratch']
  %s0 = inlined_call_operand.vmem [shape: f32[16,16], index: 0, kind: input, shape index: {}]
  %s1 = inlined_call_operand.vmem [shape: f32[16,32], index: 1, kind: input, shape index: {}]
  %s2 = inlined_call_operand.vmem [shape: f32[16,32], index: 2, kind: input, shape index: {}]
  %s3 = inlined_call_operand.vmem [shape: f32[32,32], index: 3, kind: input, shape index: {}]
  %s4 = inlined_call_operand.vmem [shape: f32[1,32], index: 4, kind: input, shape index: {}]
  %s5 = inlined_call_operand.vmem [shape: f32[32,128], index: 5, kind: input, shape index: {}]
  %s6 = inlined_call_operand.vmem [shape: f32[1,128], index: 6, kind: input, shape index: {}]
  %s7 = inlined_call_operand.vmem [shape: f32[16,128], index: 7, kind: output, shape index: {0}]
  %s8 = inlined_call_operand.hbm [shape: f32[16,32], index: 8, kind: output, shape index: {1}]
  %9 = xla_tuple %s7, %s8
  %s10 = sld [smem:[#allocation0]]
  $region46: #{rnn_encoder_step.1} parent=0
    _
  %s12 = ssub.s32 1, %s10
  %s13 = scalar_select 0, %s12, %s10
  $region1: #{rnn_encoder_step.1} parent=0
    #allocation2 [shape = 'u8[8192]{0}', space=vmem, size = 0x2000, scoped, tag = 'output window, operand 1, single buffered']
    #allocation3 [shape = 's32[1]{0}', space=sflag, size = 0x4, scoped, tag = 'scoped memory for rnn_encoder_step.1']
    %14 = vsyncpa [#allocation3], 0
    // Predicated region
    $region2: #{rnn_encoder_step.1} parent=1 // pred_check
      _
    $region3: #{rnn_encoder_step.1} parent=1 // pred_check_branch
      %16 = sbr.rel (0) target = $region5
    $region4: #{rnn_encoder_step.1} parent=1 // pred_region
      _
    $region5: #{rnn_encoder_step.1} parent=1 // pred_fallthru
      _
    // Predicated region
    $region6: #{rnn_encoder_step.1} parent=1 // pred_check
      _
    $region7: #{rnn_encoder_step.1} parent=1 // pred_check_branch
      %18 = sbr.rel (0) target = $region9
    $region8: #{rnn_encoder_step.1} parent=1 // pred_region
      _
    $region9: #{rnn_encoder_step.1} parent=1 // pred_fallthru
      _
    // Predicated region
    $region10: #{rnn_encoder_step.1} parent=1 // pred_check
      _
    $region11: #{rnn_encoder_step.1} parent=1 // pred_check_branch
      %20 = sbr.rel (0) target = $region13
    $region12: #{rnn_encoder_step.1} parent=1 // pred_region
      _
    $region13: #{rnn_encoder_step.1} parent=1 // pred_fallthru
      _
    // Predicated region
    $region14: #{rnn_encoder_step.1} parent=1 // pred_check
      _
    $region15: #{rnn_encoder_step.1} parent=1 // pred_check_branch
      %22 = sbr.rel (0) target = $region17
    $region16: #{rnn_encoder_step.1} parent=1 // pred_region
      _
    $region17: #{rnn_encoder_step.1} parent=1 // pred_fallthru
      _
    // Predicated region
    $region18: #{rnn_encoder_step.1} parent=1 // pred_check
      _
    $region19: #{rnn_encoder_step.1} parent=1 // pred_check_branch
      %24 = sbr.rel (0) target = $region21
    $region20: #{rnn_encoder_step.1} parent=1 // pred_region
      _
    $region21: #{rnn_encoder_step.1} parent=1 // pred_fallthru
      _
    // Predicated region
    $region22: #{rnn_encoder_step.1} parent=1 // pred_check
      _
    $region23: #{rnn_encoder_step.1} parent=1 // pred_check_branch
      %26 = sbr.rel (0) target = $region25
    $region24: #{rnn_encoder_step.1} parent=1 // pred_region
      _
    $region25: #{rnn_encoder_step.1} parent=1 // pred_fallthru
      _
    // Predicated region
    $region26: #{rnn_encoder_step.1} parent=1 // pred_check
      _
    $region27: #{rnn_encoder_step.1} parent=1 // pred_check_branch
      %28 = sbr.rel (0) target = $region29
    $region28: #{rnn_encoder_step.1} parent=1 // pred_region
      _
    $region29: #{rnn_encoder_step.1} parent=1 // pred_fallthru
      _
    %v29 = vld [vmem:[%s0] sm:$0xff]
    %v30 = vld [vmem:[%s0 + $0x8] sm:$0xff]
    %v31 = vld [vmem:[%s2] sm:$0xff]
    %v32 = vld [vmem:[%s2 + $0x8] sm:$0xff]
    %v33 = vld [vmem:[%s1] sm:$0xff]
    %v34 = vld [vmem:[%s1 + $0x8] sm:$0xff]
    %v35 = vld [vmem:[%s3] sm:$0xff]
    %v36 = vld [vmem:[%s3 + $0x8] sm:$0xff]
    %v37 = vld [vmem:[%s3 + $0x10] sm:$0xff]
    %v38 = vld [vmem:[%s3 + $0x18] sm:$0xff]
    %vm39 = vcmask 261120
    %v41 = vsel %vm39, %v33, 0
    %v44 = vsel %vm39, %v34, 0
    %46 = vmatpush.msra.mxu0 0.0
    %47 = vmatpush.msra.mxu0 0.0
    %48 = vmatpush.msra.mxu0 0.0
    %49 = vmatpush.msra.mxu0 0.0
    %50 = vmatpush.msra.mxu0 0.0
    %51 = vmatpush.msra.mxu0 0.0
    %52 = vmatpush.msra.mxu0 0.0
    %53 = vmatpush.msra.mxu0 0.0
    %54 = vmatpush.msra.mxu0 0.0
    %55 = vmatpush.msra.mxu0 0.0
    %56 = vmatpush.msra.mxu0 0.0
    %57 = vmatpush.msra.mxu0 0.0
    %58 = vmatpush.msra.mxu0 %v38
    %59 = vmatpush.msra.mxu0 %v37
    %60 = vmatpush.msra.mxu0 %v36
    %61 = vmatpush.msra.mxu0 %v35
    %62 = vmatmul.f32.gmra.mxu0 %v41
    %v63 = vpop.f32.mrf.mxu0
    %v64 = vadd.f32 0.0, %v63
    %65 = vmatmul.f32.gmra.mxu0 %v44
    %v66 = vpop.f32.mrf.mxu0
    %v67 = vadd.f32 0.0, %v66
    %68 = vdwg.mxu0
    %vm69 = vcmask 130048
    %v71 = vsel %vm69, %v29, 0
    %v74 = vsel %vm69, %v30, 0
    %76 = vmatpush.msra.mxu0 0.0
    %77 = vmatpush.msra.mxu0 0.0
    %78 = vmatpush.msra.mxu0 0.0
    %79 = vmatpush.msra.mxu0 0.0
    %80 = vmatpush.msra.mxu0 0.0
    %81 = vmatpush.msra.mxu0 0.0
    %82 = vmatpush.msra.mxu0 0.0
    %83 = vmatpush.msra.mxu0 0.0
    %84 = vmatpush.msra.mxu0 0.0
    %85 = vmatpush.msra.mxu0 0.0
    %86 = vmatpush.msra.mxu0 0.0
    %87 = vmatpush.msra.mxu0 0.0
    %88 = vmatpush.msra.mxu0 0.0
    %89 = vmatpush.msra.mxu0 0.0
    %90 = vmatpush.msra.mxu0 %v32
    %91 = vmatpush.msra.mxu0 %v31
    %92 = vmatmul.f32.gmra.mxu0 %v71
    %v93 = vpop.f32.mrf.mxu0
    %v94 = vadd.f32 %v64, %v93
    %95 = vmatmul.f32.gmra.mxu0 %v74
    %v96 = vpop.f32.mrf.mxu0
    %v97 = vadd.f32 %v67, %v96
    %98 = vdwg.mxu0
    %v99 = vld [vmem:[%s4] sm:$0x1]
    %v101 = vperm.slane %v99, 0
    %v103 = vadd.f32 %v94, %v101
    %v104 = vadd.f32 %v97, %v101
    %v105 = vld [vmem:[%s5] sm:$0xff]
    %v106 = vld [vmem:[%s5 + $0x8] sm:$0xff]
    %v107 = vld [vmem:[%s5 + $0x10] sm:$0xff]
    %v108 = vld [vmem:[%s5 + $0x18] sm:$0xff]
    %v109 = vld [vmem:[%s6] sm:$0x1]
    %v111 = vperm.slane %v109, 0
    %v114 = vsel %vm39, %v103, 0
    %v117 = vsel %vm39, %v104, 0
    %119 = vmatpush.msra.mxu0 0.0
    %120 = vmatpush.msra.mxu0 0.0
    %121 = vmatpush.msra.mxu0 0.0
    %122 = vmatpush.msra.mxu0 0.0
    %123 = vmatpush.msra.mxu0 0.0
    %124 = vmatpush.msra.mxu0 0.0
    %125 = vmatpush.msra.mxu0 0.0
    %126 = vmatpush.msra.mxu0 0.0
    %127 = vmatpush.msra.mxu0 0.0
    %128 = vmatpush.msra.mxu0 0.0
    %129 = vmatpush.msra.mxu0 0.0
    %130 = vmatpush.msra.mxu0 0.0
    %131 = vmatpush.msra.mxu0 %v108
    %132 = vmatpush.msra.mxu0 %v107
    %133 = vmatpush.msra.mxu0 %v106
    %134 = vmatpush.msra.mxu0 %v105
    %135 = vmatmul.f32.gmra.mxu0 %v114
    %v136 = vpop.f32.mrf.mxu0
    %v137 = vadd.f32 %v111, %v136
    %138 = vmatmul.f32.gmra.mxu0 %v117
    %v139 = vpop.f32.mrf.mxu0
    %v140 = vadd.f32 %v111, %v139
    %141 = vdwg.mxu0
    %142 = vmax.xlane.f32.xlu0 %v137
    %v143 = vpop.xlane.xlu0 %142
    %144 = vmax.xlane.f32.xlu0 %v140
    %v145 = vpop.xlane.xlu0 %144
    %v146 = vsub.f32 %v137, %v143
    %v147 = vsub.f32 %v140, %v145
    %v148 = vmul.f32 %v146, 1.442695
    %v149 = vpow.pop %v148
    %v150 = vmul.f32 %v147, 1.442695
    %v151 = vpow.pop %v150
    %152 = vadd.xlane.f32.xlu0 %v149
    %v153 = vpop.xlane.xlu0 %152
    %154 = vadd.xlane.f32.xlu0 %v151
    %v155 = vpop.xlane.xlu0 %154
    %v156 = vlog2.pop %v153
    %v157 = vmul.f32 %v156, 0.6931472
    %v158 = vlog2.pop %v155
    %v159 = vmul.f32 %v158, 0.6931472
    %v160 = vsub.f32 %v146, %v157
    %v161 = vsub.f32 %v147, %v159
    %162 = vst [vmem:[%s7] sm:$0xff] %v160
    %163 = vst [vmem:[%s7 + $0x8] sm:$0xff] %v161
    %164 = vst.msk [vmem:[#allocation2] sm:$0xff] %vm39, %v103
    %165 = vst.msk [vmem:[#allocation2 + $0x8] sm:$0xff] %vm39, %v104
    // Predicated region
    $region30: #{rnn_encoder_step.1} parent=1 // pred_check
      _
    $region31: #{rnn_encoder_step.1} parent=1 // pred_check_branch
      %167 = sbr.rel (0) target = $region33
    $region32: #{rnn_encoder_step.1} parent=1 // pred_region
      _
    $region33: #{rnn_encoder_step.1} parent=1 // pred_fallthru
      _
    // Predicated region
    $region34: #{rnn_encoder_step.1} parent=1 // pred_check
      _
    $region35: #{rnn_encoder_step.1} parent=1 // pred_check_branch
      %169 = sbr.rel (0) target = $region37
    $region36: #{rnn_encoder_step.1} parent=1 // pred_region
      %171 = vsyncadd [#allocation3], 0
      %s172 = sshll.u32 [#allocation2], 4
      %s173 = int_to_ptr.vmem [resolvable:$true] %s172
      %s174 = sshll.u32 %s8, 4
      %s175 = int_to_ptr.hbm [resolvable:$true] %s174
      %180 = dma.vmem_to_hbm [thread:$0]  %s173, 256, %s175, [#allocation3], 128, 128, 8
    $region37: #{rnn_encoder_step.1} parent=1 // pred_fallthru
      _
    // Predicated region
    $region38: #{rnn_encoder_step.1} parent=1 // pred_check
      _
    $region39: #{rnn_encoder_step.1} parent=1 // pred_check_branch
      %182 = sbr.rel (0) target = $region41
    $region40: #{rnn_encoder_step.1} parent=1 // pred_region
      _
    $region41: #{rnn_encoder_step.1} parent=1 // pred_fallthru
      _
    // Predicated region
    $region42: #{rnn_encoder_step.1} parent=1 // pred_check
      _
    $region43: #{rnn_encoder_step.1} parent=1 // pred_check_branch
      %184 = sbr.rel (0) target = $region45
    $region44: #{rnn_encoder_step.1} parent=1 // pred_region
      %186 = dma.done [#allocation3], 256
    $region45: #{rnn_encoder_step.1} parent=1 // pred_fallthru
      _
    %187 = vsyncpa [#allocation3], 1

</llo_original>
